<compile_context>
chip_gen: v5e
topology: v5e:2x2
jax: 0.10.0
libtpu: 0.0.40
codegen_flags: <defaults>
</compile_context>

<pallas_src>
import math

import jax
import jax.numpy as jnp
from jax.experimental import pallas as pl
from jax.experimental.pallas import tpu as pltpu


def _round_up(x, m):
    return ((x + m - 1) // m) * m


def mlp_kernel(w1_ref, w_ref, b_ref, x_ref, o_ref):
    """One batch tile of the 4-layer MLP.

    x_ref : (TB, F)    f32  batch-major tile, straight from HBM (no transpose)
    w1_ref: (16, F)    f32  layer-1 weights, PyTorch [out, in], zero-padded rows
    w_ref : (2,16,16)  bf16 layers 2/3 weights, [out, in], zero-padded
    b_ref : (5,16,1)   f32  [b1, b2, b3, b4, output-layer weight column]
    o_ref : (1, TB)    f32  lane-dense output tile
    """
    x = x_ref[...]                                           # (TB, F)

    # Layer 1: contract over the feature axis (NT matmul) so the batch lands on
    # the lane axis: z[h, b] = sum_f W1[h, f] * x[b, f].
    z = jax.lax.dot_general(
        w1_ref[...], x, (((1,), (1,)), ((), ())),
        preferred_element_type=jnp.float32)                  # (16, TB)
    z = jnp.maximum(z + b_ref[0], 0.0)

    # Layers 2/3: bf16 MXU operands, f32 accumulation.
    z = jnp.dot(w_ref[0], z.astype(jnp.bfloat16),
                preferred_element_type=jnp.float32)          # (16, TB)
    z = jnp.maximum(z + b_ref[1], 0.0)

    z = jnp.dot(w_ref[1], z.astype(jnp.bfloat16),
                preferred_element_type=jnp.float32)          # (16, TB)
    z = jnp.maximum(z + b_ref[2], 0.0)

    # TODO(synk): Dropout(p=0.12409...) is identity in eval/inference mode;
    # training-mode dropout would need pltpu.prng_seed + a Bernoulli mask with
    # 1/(1-p) rescaling.

    # Output layer (15 -> 1): elementwise multiply by the f32 weight column and
    # a sublane reduction instead of a degenerate MXU matmul.
    out = jnp.sum(b_ref[4] * z, axis=0, keepdims=True) + b_ref[3][0:1, :]
    o_ref[...] = out.astype(o_ref.dtype)                     # (1, TB)


def pack_params(params):
    """Pack PyTorch-layout weights into the kernel's fixed-width blocks.

    Call this ONCE and reuse the result; the zero-pad scatters are then never
    re-materialized on the per-call path.
    """
    n_features = params["w1"].shape[1]

    # Layer 1 weights, f32, [out, in], padded to 16 output rows.
    w1 = jnp.zeros((16, n_features), jnp.float32)
    w1 = w1.at[:5, :].set(params["w1"].astype(jnp.float32))

    # Layers 2/3 weights, bf16, [out, in], padded to 16x16.
    w = jnp.zeros((2, 16, 16), jnp.bfloat16)
    w = w.at[0, :10, :5].set(params["w2"].astype(jnp.bfloat16))
    w = w.at[1, :15, :10].set(params["w3"].astype(jnp.bfloat16))

    # Biases (f32) + the output layer's weight column (kept f32 for accuracy).
    b = jnp.zeros((5, 16, 1), jnp.float32)
    b = b.at[0, :5, 0].set(params["b1"])
    b = b.at[1, :10, 0].set(params["b2"])
    b = b.at[2, :15, 0].set(params["b3"])
    b = b.at[3, 0, 0].set(params["b4"][0])
    b = b.at[4, :15, 0].set(params["w4"][0, :])
    return w1, w, b


def _choose_batch_tile(batch, n_features):
    """Pick the batch-tile size (lanes of the output / sublanes of the x block).

    Big tiles amortize the ~0.35 us per-grid-step overhead; the cap keeps one
    double-buffered x block at <= ~8 MiB of (lane-padded) VMEM for any feature
    width.  Batches <= 1024 use a single exact-size tile (no padding, no edge
    masking); bigger batches target >= 2 tiles so v7x's two TensorCores both
    get work via the "parallel" grid axis.
    """
    lane_bytes = _round_up(max(n_features, 1), 128) * 4
    tb_cap = max(256, min(8192, ((4 << 20) // lane_bytes) // 256 * 256))
    if batch <= min(1024, tb_cap):
        return max(batch, 1)
    tb = min(tb_cap, _round_up(pl.cdiv(batch, 2), 128))
    return max(tb, 128)


def neural_networks_forward(x, packed_params):
    """x: [B, n_features]; packed_params: result of pack_params (hoisted)."""
    w1, w_stack, b_stack = packed_params
    batch, n_features = x.shape
    if x.dtype != jnp.float32:
        x = x.astype(jnp.float32)

    tb = _choose_batch_tile(batch, n_features)
    n_tiles = pl.cdiv(batch, tb)
    out_len = n_tiles * tb          # only the final (ragged) x tile is masked

    out = pl.pallas_call(
        mlp_kernel,
        out_shape=jax.ShapeDtypeStruct((1, out_len), jnp.float32),
        grid_spec=pltpu.PrefetchScalarGridSpec(
            num_scalar_prefetch=0,
            grid=(n_tiles,),
            in_specs=[
                # Parameter blocks: constant index maps -> DMA'd once, VMEM
                # resident across all batch tiles.  (They total < 3 KiB, so the
                # default double-buffering is free; pl.Buffered(1) only matters
                # for large weight blocks.)
                pl.BlockSpec((16, n_features), lambda i: (0, 0)),
                pl.BlockSpec((2, 16, 16), lambda i: (0, 0, 0)),
                pl.BlockSpec((5, 16, 1), lambda i: (0, 0, 0)),
                # Batch-tiled x, read directly from its [B, F] HBM layout.
                pl.BlockSpec((tb, n_features), lambda i: (i, 0)),
            ],
            out_specs=pl.BlockSpec((1, tb), lambda i: (0, i)),
        ),
        compiler_params=pltpu.CompilerParams(
            dimension_semantics=("parallel",),
            vmem_limit_bytes=32 * 1024 * 1024,
        ),
    )(w1, w_stack, b_stack, x)

    # Strip any tile padding and return PyTorch-shaped [B, 1].
    return out[0, :batch, None]


def xavier_uniform(key, fan_out, fan_in):
    # torch.nn.init.xavier_uniform_ on a [out, in] weight:
    #   U(-a, a), a = sqrt(6 / (fan_in + fan_out))
    a = math.sqrt(6.0 / (fan_in + fan_out))
    return jax.random.uniform(key, (fan_out, fan_in), jnp.float32, -a, a)


def init_params(key, n_features):
    k1, k2, k3, k4 = jax.random.split(key, 4)
    return {
        "w1": xavier_uniform(k1, 5, n_features),
        "b1": jnp.zeros((5,), jnp.float32),
        "w2": xavier_uniform(k2, 10, 5),
        "b2": jnp.zeros((10,), jnp.float32),
        "w3": xavier_uniform(k3, 15, 10),
        "b3": jnp.zeros((15,), jnp.float32),
        "w4": xavier_uniform(k4, 1, 15),
        "b4": jnp.zeros((1,), jnp.float32),
    }


if __name__ == "__main__":
    key = jax.random.PRNGKey(0)
    kx, kp = jax.random.split(key)

    n_features = 8
    batch = 8
    x = jax.random.normal(kx, (batch, n_features), jnp.float32)
    params = init_params(kp, n_features)

    packed = pack_params(params)      # hoisted: pack once, reuse every call

    out = neural_networks_forward(x, packed)
    out = jax.block_until_ready(out)

    # Pure-JAX f32 reference (PyTorch layout: y = x @ W.T + b, dropout in eval)
    def ref(x, p):
        z = jnp.maximum(x @ p["w1"].T + p["b1"], 0.0)
        z = jnp.maximum(z @ p["w2"].T + p["b2"], 0.0)
        z = jnp.maximum(z @ p["w3"].T + p["b3"], 0.0)
        return z @ p["w4"].T + p["b4"]

    expected = ref(x, params)
    assert out.shape == (batch, 1), out.shape
    # Layers 2/3 feed the MXU bf16 operands (f32 accumulate), so compare with a
    # bf16-appropriate tolerance rather than 1e-5.
    assert jnp.allclose(out, expected, atol=5e-2, rtol=5e-2), (
        float(jnp.max(jnp.abs(out - expected))))

    print("KERNEL_OK")
</pallas_src>

<mosaic_0001>
module attributes {stable_mosaic.version = 11 : i64} {
  func.func @mlp_kernel(%arg0: i32, %arg1: memref<16x8xf32, #tpu.memory_space<vmem>>, %arg2: memref<2x16x16xbf16, #tpu.memory_space<vmem>>, %arg3: memref<5x16x1xf32, #tpu.memory_space<vmem>>, %arg4: memref<8x8xf32, #tpu.memory_space<vmem>>, %arg5: memref<1x8xf32, #tpu.memory_space<vmem>>) attributes {dimension_semantics = [#tpu.dimension_semantics<parallel>], iteration_bounds = array<i64: 1>, scalar_prefetch = 0 : i64, scratch_operands = 0 : i64, tpu.core_type = #tpu.core_type<tc>, window_params = [{pipeline_mode = #tpu.pipeline_mode<synchronous>, transform_indices = @transform_0, window_bounds = array<i64: 16, 8>}, {pipeline_mode = #tpu.pipeline_mode<synchronous>, transform_indices = @transform_1, window_bounds = array<i64: 2, 16, 16>}, {pipeline_mode = #tpu.pipeline_mode<synchronous>, transform_indices = @transform_2, window_bounds = array<i64: 5, 16, 1>}, {transform_indices = @transform_3, window_bounds = array<i64: 8, 8>}, {transform_indices = @transform_4, window_bounds = array<i64: 1, 8>}]} {
    %c0 = arith.constant 0 : index
    %c0_0 = arith.constant 0 : index
    %0 = vector.load %arg4[%c0, %c0_0] : memref<8x8xf32, #tpu.memory_space<vmem>>, vector<8x8xf32>
    %c0_1 = arith.constant 0 : index
    %c0_2 = arith.constant 0 : index
    %1 = vector.load %arg1[%c0_1, %c0_2] : memref<16x8xf32, #tpu.memory_space<vmem>>, vector<16x8xf32>
    %cst = arith.constant dense<0.000000e+00> : vector<16x8xf32>
    %2 = tpu.matmul %1, %0, %cst {dimension_numbers = #tpu.dot_dimension_numbers<[1], [1], [0], [0], [0, 0, 1, 0], [], []>} : vector<16x8xf32>, vector<8x8xf32>, vector<16x8xf32> -> vector<16x8xf32>
    %c0_3 = arith.constant 0 : index
    %c0_4 = arith.constant 0 : index
    %c0_5 = arith.constant 0 : index
    %3 = vector.load %arg3[%c0_3, %c0_4, %c0_5] : memref<5x16x1xf32, #tpu.memory_space<vmem>>, vector<1x16x1xf32>
    %4 = vector.shape_cast %3 : vector<1x16x1xf32> to vector<16x1xf32>
    %5 = vector.broadcast %4 : vector<16x1xf32> to vector<16x8xf32>
    %6 = arith.addf %2, %5 : vector<16x8xf32>
    %cst_6 = arith.constant 0.000000e+00 : f32
    %7 = vector.broadcast %cst_6 : f32 to vector<16x8xf32>
    %8 = arith.maximumf %6, %7 : vector<16x8xf32>
    %c0_7 = arith.constant 0 : index
    %c0_8 = arith.constant 0 : index
    %c0_9 = arith.constant 0 : index
    %9 = vector.load %arg2[%c0_7, %c0_8, %c0_9] : memref<2x16x16xbf16, #tpu.memory_space<vmem>>, vector<1x16x16xbf16>
    %10 = vector.shape_cast %9 : vector<1x16x16xbf16> to vector<16x16xbf16>
    %11 = arith.truncf %8 : vector<16x8xf32> to vector<16x8xbf16>
    %cst_10 = arith.constant dense<0.000000e+00> : vector<16x8xf32>
    %12 = tpu.matmul %10, %11, %cst_10 {dimension_numbers = #tpu.dot_dimension_numbers<[1], [0], [0], [1], [0, 0, 1, 1], [], []>} : vector<16x16xbf16>, vector<16x8xbf16>, vector<16x8xf32> -> vector<16x8xf32>
    %c1 = arith.constant 1 : index
    %c0_11 = arith.constant 0 : index
    %c0_12 = arith.constant 0 : index
    %13 = vector.load %arg3[%c1, %c0_11, %c0_12] : memref<5x16x1xf32, #tpu.memory_space<vmem>>, vector<1x16x1xf32>
    %14 = vector.shape_cast %13 : vector<1x16x1xf32> to vector<16x1xf32>
    %15 = vector.broadcast %14 : vector<16x1xf32> to vector<16x8xf32>
    %16 = arith.addf %12, %15 : vector<16x8xf32>
    %cst_13 = arith.constant 0.000000e+00 : f32
    %17 = vector.broadcast %cst_13 : f32 to vector<16x8xf32>
    %18 = arith.maximumf %16, %17 : vector<16x8xf32>
    %c1_14 = arith.constant 1 : index
    %c0_15 = arith.constant 0 : index
    %c0_16 = arith.constant 0 : index
    %19 = vector.load %arg2[%c1_14, %c0_15, %c0_16] : memref<2x16x16xbf16, #tpu.memory_space<vmem>>, vector<1x16x16xbf16>
    %20 = vector.shape_cast %19 : vector<1x16x16xbf16> to vector<16x16xbf16>
    %21 = arith.truncf %18 : vector<16x8xf32> to vector<16x8xbf16>
    %cst_17 = arith.constant dense<0.000000e+00> : vector<16x8xf32>
    %22 = tpu.matmul %20, %21, %cst_17 {dimension_numbers = #tpu.dot_dimension_numbers<[1], [0], [0], [1], [0, 0, 1, 1], [], []>} : vector<16x16xbf16>, vector<16x8xbf16>, vector<16x8xf32> -> vector<16x8xf32>
    %c2 = arith.constant 2 : index
    %c0_18 = arith.constant 0 : index
    %c0_19 = arith.constant 0 : index
    %23 = vector.load %arg3[%c2, %c0_18, %c0_19] : memref<5x16x1xf32, #tpu.memory_space<vmem>>, vector<1x16x1xf32>
    %24 = vector.shape_cast %23 : vector<1x16x1xf32> to vector<16x1xf32>
    %25 = vector.broadcast %24 : vector<16x1xf32> to vector<16x8xf32>
    %26 = arith.addf %22, %25 : vector<16x8xf32>
    %cst_20 = arith.constant 0.000000e+00 : f32
    %27 = vector.broadcast %cst_20 : f32 to vector<16x8xf32>
    %28 = arith.maximumf %26, %27 : vector<16x8xf32>
    %c4 = arith.constant 4 : index
    %c0_21 = arith.constant 0 : index
    %c0_22 = arith.constant 0 : index
    %29 = vector.load %arg3[%c4, %c0_21, %c0_22] : memref<5x16x1xf32, #tpu.memory_space<vmem>>, vector<1x16x1xf32>
    %30 = vector.shape_cast %29 : vector<1x16x1xf32> to vector<16x1xf32>
    %31 = vector.broadcast %30 : vector<16x1xf32> to vector<16x8xf32>
    %32 = arith.mulf %31, %28 : vector<16x8xf32>
    %cst_23 = arith.constant dense<0.000000e+00> : vector<8xf32>
    %33 = vector.multi_reduction <add>, %32, %cst_23 [0] : vector<16x8xf32> to vector<8xf32>
    %34 = vector.shape_cast %33 : vector<8xf32> to vector<1x8xf32>
    %c3 = arith.constant 3 : index
    %c0_24 = arith.constant 0 : index
    %c0_25 = arith.constant 0 : index
    %35 = vector.load %arg3[%c3, %c0_24, %c0_25] : memref<5x16x1xf32, #tpu.memory_space<vmem>>, vector<1x16x1xf32>
    %36 = vector.shape_cast %35 : vector<1x16x1xf32> to vector<16x1xf32>
    %37 = vector.extract_strided_slice %36 {offsets = [0, 0], sizes = [1, 1], strides = [1, 1]} : vector<16x1xf32> to vector<1x1xf32>
    %38 = vector.broadcast %37 : vector<1x1xf32> to vector<1x8xf32>
    %39 = arith.addf %34, %38 : vector<1x8xf32>
    %c0_26 = arith.constant 0 : index
    %c0_27 = arith.constant 0 : index
    %40 = vector.load %arg5[%c0_26, %c0_27] : memref<1x8xf32, #tpu.memory_space<vmem>>, vector<1x8xf32>
    tpu.vector_store %arg5[%c0_26, %c0_27], %39 {strides = array<i32>} : memref<1x8xf32, #tpu.memory_space<vmem>>, vector<1x8xf32>,
    return
  }
  func.func @transform_0(%arg0: i32) -> (i32, i32) {
    %c0_i32 = arith.constant 0 : i32
    %c0_i32_0 = arith.constant 0 : i32
    %c0_i32_1 = arith.constant 0 : i32
    return %c0_i32, %c0_i32_0 : i32, i32
  }
  func.func @transform_1(%arg0: i32) -> (i32, i32, i32) {
    %c0_i32 = arith.constant 0 : i32
    %c0_i32_0 = arith.constant 0 : i32
    %c0_i32_1 = arith.constant 0 : i32
    %c0_i32_2 = arith.constant 0 : i32
    return %c0_i32, %c0_i32_0, %c0_i32_1 : i32, i32, i32
  }
  func.func @transform_2(%arg0: i32) -> (i32, i32, i32) {
    %c0_i32 = arith.constant 0 : i32
    %c0_i32_0 = arith.constant 0 : i32
    %c0_i32_1 = arith.constant 0 : i32
    %c0_i32_2 = arith.constant 0 : i32
    return %c0_i32, %c0_i32_0, %c0_i32_1 : i32, i32, i32
  }
  func.func @transform_3(%arg0: i32) -> (i32, i32) {
    %c0_i32 = arith.constant 0 : i32
    %c0_i32_0 = arith.constant 0 : i32
    return %arg0, %c0_i32 : i32, i32
  }
  func.func @transform_4(%arg0: i32) -> (i32, i32) {
    %c0_i32 = arith.constant 0 : i32
    %c0_i32_0 = arith.constant 0 : i32
    return %c0_i32, %arg0 : i32, i32
  }
}

</mosaic_0001>

<llo_original>
// kernel: tpu_custom_call.1
$region0: #{tpu_custom_call.1}
  #allocation0 [shape = 'u32[]', space=smem, size = 0x4, offset = 0x4, fixed_abs, tag = 'smem constant byte address 0x4 - core index']
  #allocation1 [shape = 'u32[72,128]{1,0:T(1,128)}', space=vmem, size = 0x9000, scoped, tag = 'internal scratch']
  %s0 = inlined_call_operand.vmem [shape: f32[16,8], index: 0, kind: input, shape index: {}]
  %s1 = inlined_call_operand.vmem [shape: bf16[2,16,16], index: 1, kind: input, shape index: {}]
  %s2 = inlined_call_operand.vmem [shape: f32[5,16,1], index: 2, kind: input, shape index: {}]
  %s3 = inlined_call_operand.vmem [shape: f32[8,8], index: 3, kind: input, shape index: {}]
  %s4 = inlined_call_operand.hbm [shape: f32[1,8], index: 4, kind: output, shape index: {}]
  %s5 = sld [smem:[#allocation0]]
  $region26: #{tpu_custom_call.1} parent=0
    _
  %s7 = ssub.s32 1, %s5
  %s8 = scalar_select 0, %s7, %s5
  $region1: #{tpu_custom_call.1} parent=0
    #allocation2 [shape = 'u8[512]{0}', space=vmem, size = 0x400, scoped, tag = 'output window, operand 0, single buffered']
    #allocation3 [shape = 's32[1]{0}', space=sflag, size = 0x4, scoped, tag = 'scoped memory for tpu_custom_call.1']
    %9 = vsyncpa [#allocation3], 0
    // Predicated region
    $region2: #{tpu_custom_call.1} parent=1 // pred_check
      _
    $region3: #{tpu_custom_call.1} parent=1 // pred_check_branch
      %11 = sbr.rel (0) target = $region5
    $region4: #{tpu_custom_call.1} parent=1 // pred_region
      _
    $region5: #{tpu_custom_call.1} parent=1 // pred_fallthru
      _
    // Predicated region
    $region6: #{tpu_custom_call.1} parent=1 // pred_check
      _
    $region7: #{tpu_custom_call.1} parent=1 // pred_check_branch
      %13 = sbr.rel (0) target = $region9
    $region8: #{tpu_custom_call.1} parent=1 // pred_region
      _
    $region9: #{tpu_custom_call.1} parent=1 // pred_fallthru
      _
    // Predicated region
    $region10: #{tpu_custom_call.1} parent=1 // pred_check
      _
    $region11: #{tpu_custom_call.1} parent=1 // pred_check_branch
      %15 = sbr.rel (0) target = $region13
    $region12: #{tpu_custom_call.1} parent=1 // pred_region
      _
    $region13: #{tpu_custom_call.1} parent=1 // pred_fallthru
      _
    // Predicated region
    $region14: #{tpu_custom_call.1} parent=1 // pred_check
      _
    $region15: #{tpu_custom_call.1} parent=1 // pred_check_branch
      %17 = sbr.rel (0) target = $region17
    $region16: #{tpu_custom_call.1} parent=1 // pred_region
      _
    $region17: #{tpu_custom_call.1} parent=1 // pred_fallthru
      _
    %v19 = vld [vmem:[%s3] sm:$0xff]
    %v20 = vld [vmem:[%s0] sm:$0xff]
    %v21 = vld [vmem:[%s0 + $0x8] sm:$0xff]
    %v22 = vld [vmem:[%s2] sm:$0xff]
    %v23 = vld [vmem:[%s2 + $0x8] sm:$0xff]
    %25 = vset.pattern.permute.xlu0 0
    %26 = vperm.xlu0 %25, %v22
    %v27 = vpop.permute.xlu0 %26
    %30 = vset.pattern.permute.xlu0 0
    %31 = vperm.xlu0 %30, %v23
    %v32 = vpop.permute.xlu0 %31
    %vm34 = vcmask 64512
    %v36 = vsel %vm34, %v20, 0
    %v39 = vsel %vm34, %v21, 0
    %v42 = vsel %vm34, %v19, 0
    %44 = vmatpush.xpose.msra.mxu0 0.0
    %45 = vmatpush.xpose.msra.mxu0 0.0
    %46 = vmatpush.xpose.msra.mxu0 0.0
    %47 = vmatpush.xpose.msra.mxu0 0.0
    %48 = vmatpush.xpose.msra.mxu0 0.0
    %49 = vmatpush.xpose.msra.mxu0 0.0
    %50 = vmatpush.xpose.msra.mxu0 0.0
    %51 = vmatpush.xpose.msra.mxu0 0.0
    %52 = vmatpush.xpose.msra.mxu0 0.0
    %53 = vmatpush.xpose.msra.mxu0 0.0
    %54 = vmatpush.xpose.msra.mxu0 0.0
    %55 = vmatpush.xpose.msra.mxu0 0.0
    %56 = vmatpush.xpose.msra.mxu0 0.0
    %57 = vmatpush.xpose.msra.mxu0 0.0
    %58 = vmatpush.xpose.msra.mxu0 0.0
    %59 = vmatpush.xpose.msra.mxu0 %v42
    %60 = vmatmul.f32.gmra.mxu0 %v36
    %v61 = vpop.f32.mrf.mxu0
    %v62 = vadd.f32 %v27, %v61
    %63 = vmatmul.f32.gmra.mxu0 %v39
    %v64 = vpop.f32.mrf.mxu0
    %v65 = vadd.f32 %v32, %v64
    %66 = vdwg.mxu0
    %v67 = vmax.f32 %v62, 0.0
    %v68 = vmax.f32 %v65, 0.0
    %v69 = vld [vmem:[%s1] sm:$0xf]
    %v70 = vld [vmem:[%s1 + $0x4] sm:$0xf]
    %v71 = vpack.c.bf16 %v68, %v67
    %s72 = scalar_lea.vmem %s2, 16
    %v73 = vld [vmem:[%s72] sm:$0xff]
    %v74 = vld [vmem:[%s72 + $0x8] sm:$0xff]
    %76 = vset.pattern.permute.xlu0 0
    %77 = vperm.xlu0 %76, %v73
    %v78 = vpop.permute.xlu0 %77
    %81 = vset.pattern.permute.xlu0 0
    %82 = vperm.xlu0 %81, %v74
    %v83 = vpop.permute.xlu0 %82
    %v87 = vunpack.c.l.b16 %v69
    %v88 = vunpack.c.l.b16 %v70
    %v89 = vpack.c.b16 %v88, %v87
    %vm90 = vcmask 130048
    %v92 = vsel %vm90, %v89, 0
    %94 = vmatpush.bf16.msra.mxu0 0
    %95 = vmatpush.bf16.msra.mxu0 0
    %96 = vmatpush.bf16.msra.mxu0 0
    %97 = vmatpush.bf16.msra.mxu0 0
    %98 = vmatpush.bf16.msra.mxu0 0
    %99 = vmatpush.bf16.msra.mxu0 0
    %100 = vmatpush.bf16.msra.mxu0 0
    %101 = vmatpush.bf16.msra.mxu0 %v71
    %102 = vmatmul.bf16.gmra.mxu0 %v92
    %v103 = vpop.f32.mrf.mxu0
    %v104 = vadd.f32 %v78, %v103
    %v105 = vpop.f32.mrf.mxu0
    %v106 = vadd.f32 %v83, %v105
    %107 = vdwg.mxu0
    %v108 = vmax.f32 %v104, 0.0
    %v109 = vmax.f32 %v106, 0.0
    %s110 = scalar_lea.vmem %s1, 8
    %v111 = vld [vmem:[%s110] sm:$0xf]
    %v112 = vld [vmem:[%s110 + $0x4] sm:$0xf]
    %v113 = vpack.c.bf16 %v109, %v108
    %s114 = scalar_lea.vmem %s2, 32
    %v115 = vld [vmem:[%s114] sm:$0xff]
    %v116 = vld [vmem:[%s114 + $0x8] sm:$0xff]
    %118 = vset.pattern.permute.xlu0 0
    %119 = vperm.xlu0 %118, %v115
    %v120 = vpop.permute.xlu0 %119
    %123 = vset.pattern.permute.xlu0 0
    %124 = vperm.xlu0 %123, %v116
    %v125 = vpop.permute.xlu0 %124
    %v129 = vunpack.c.l.b16 %v111
    %v130 = vunpack.c.l.b16 %v112
    %v131 = vpack.c.b16 %v130, %v129
    %v133 = vsel %vm90, %v131, 0
    %135 = vmatpush.bf16.msra.mxu0 0
    %136 = vmatpush.bf16.msra.mxu0 0
    %137 = vmatpush.bf16.msra.mxu0 0
    %138 = vmatpush.bf16.msra.mxu0 0
    %139 = vmatpush.bf16.msra.mxu0 0
    %140 = vmatpush.bf16.msra.mxu0 0
    %141 = vmatpush.bf16.msra.mxu0 0
    %142 = vmatpush.bf16.msra.mxu0 %v113
    %143 = vmatmul.bf16.gmra.mxu0 %v133
    %v144 = vpop.f32.mrf.mxu0
    %v145 = vadd.f32 %v120, %v144
    %v146 = vpop.f32.mrf.mxu0
    %v147 = vadd.f32 %v125, %v146
    %148 = vdwg.mxu0
    %v149 = vmax.f32 %v145, 0.0
    %v150 = vmax.f32 %v147, 0.0
    %s151 = scalar_lea.vmem %s2, 64
    %v152 = vld [vmem:[%s151] sm:$0xff]
    %v153 = vld [vmem:[%s151 + $0x8] sm:$0xff]
    %155 = vset.pattern.permute.xlu0 0
    %156 = vperm.xlu0 %155, %v152
    %v157 = vpop.permute.xlu0 %156
    %160 = vset.pattern.permute.xlu0 0
    %161 = vperm.xlu0 %160, %v153
    %v162 = vpop.permute.xlu0 %161
    %v164 = vmul.f32 %v157, %v149
    %v165 = vmul.f32 %v162, %v150
    %v166 = vsel %vm34, %v164, 0.0
    %v167 = vsel %vm34, %v165, 0.0
    %v168 = vadd.f32 %v166, %v167
    %v169 = vrot.slane %v168, 4
    %v170 = vadd.f32 %v168, %v169
    %v171 = vrot.slane %v170, 2
    %v172 = vadd.f32 %v170, %v171
    %v173 = vrot.slane %v172, 1
    %v174 = vadd.f32 %v172, %v173
    %s175 = scalar_lea.vmem %s2, 48
    %v176 = vld [vmem:[%s175] sm:$0xff]
    %178 = vset.pattern.permute.xlu0 0
    %179 = vperm.xlu0 %178, %v176
    %v180 = vpop.permute.xlu0 %179
    %v182 = vadd.f32 %v174, %v180
    %vm183 = vcmask 57344
    %184 = vst.msk [vmem:[#allocation2] sm:$0x1] %vm183, %v182
    // Predicated region
    $region18: #{tpu_custom_call.1} parent=1 // pred_check
      _
    $region19: #{tpu_custom_call.1} parent=1 // pred_check_branch
      %186 = sbr.rel (0) target = $region21
    $region20: #{tpu_custom_call.1} parent=1 // pred_region
      %188 = vsyncadd [#allocation3], 0
      %s190 = sshll.u32 [#allocation2], 4
      %s191 = int_to_ptr.vmem [resolvable:$true] %s190
      %s192 = sshll.u32 %s4, 4
      %s193 = int_to_ptr.hbm [resolvable:$true] %s192
      %195 = dma.vmem_to_hbm [thread:$0]  %s191, 16, %s193, [#allocation3]
    $region21: #{tpu_custom_call.1} parent=1 // pred_fallthru
      _
    // Predicated region
    $region22: #{tpu_custom_call.1} parent=1 // pred_check
      _
    $region23: #{tpu_custom_call.1} parent=1 // pred_check_branch
      %197 = sbr.rel (0) target = $region25
    $region24: #{tpu_custom_call.1} parent=1 // pred_region
      %199 = dma.done [#allocation3], 16
    $region25: #{tpu_custom_call.1} parent=1 // pred_fallthru
      _
    %200 = vsyncpa [#allocation3], 1

</llo_original>
